<compile_context>
chip_gen: v5e
topology: v5e:2x2
jax: 0.10.0
libtpu: 0.0.40
codegen_flags: <defaults>
</compile_context>

<pallas_src>
import functools
import math

import jax
import jax.numpy as jnp
import numpy as np
from jax import lax
from jax.experimental import pallas as pl
from jax.experimental.pallas import tpu as pltpu


def _round_up(x, m):
    return -(-x // m) * m


def _dilconv_kernel(x_ref, w_ref, o_ref, *, offsets):
    # x_ref : (1, C_in, Lin)   zero-padded image, flattened row-major over (Hp, Wp),
    #                          zero tail-padded to Lin (multiple of 128) -> lane-dense.
    # w_ref : (T, C_out, C_in) fused (pointwise o depthwise) weight for each tap.
    # o_ref : (1, C_out, Lout) stride-1 output rows in padded-width layout,
    #                          Lout a multiple of 128 -> fully unmasked stores.
    lout = o_ref.shape[-1]
    x = x_ref[0]           # single (C_in, Lin) load; taps are in-register lane slices
    w = w_ref[...]         # single tiny (T, C_out, C_in) load

    o0 = offsets[0]
    acc = jnp.dot(w[0], x[:, o0:o0 + lout], preferred_element_type=jnp.float32)
    for t in range(1, len(offsets)):
        ot = offsets[t]
        acc = acc + jnp.dot(w[t], x[:, ot:ot + lout],
                            preferred_element_type=jnp.float32)
    o_ref[0] = acc.astype(o_ref.dtype)


def dilconv_pallas(x, w_dw, w_pw, *, stride, padding, dilation):
    """DilConv forward.

    x    : (N, C_in, H, W)      NCHW (PyTorch layout)
    w_dw : (C_in, 1, k, k)      depthwise weight (groups = C_in, bias=False)
    w_pw : (C_out, C_in, 1, 1)  pointwise 1x1 weight (bias=False)
    """
    N, Ci, H, W = x.shape
    k = w_dw.shape[-1]
    Co = w_pw.shape[0]
    d, p, s = dilation, padding, stride

    Hp, Wp = H + 2 * p, W + 2 * p
    H1 = Hp - d * (k - 1)          # stride-1 output height
    W1 = Wp - d * (k - 1)          # stride-1 output width

    # Fuse pointwise(depthwise(x)) into one dense dilated conv:
    #   Wc[o, i, ky, kx] = pw[o, i] * dw[i, 0, ky, kx]
    wc = w_pw[:, :, 0, 0][:, :, None, None] * w_dw[:, 0][None, :, :, :]
    w_taps = jnp.transpose(wc, (2, 3, 0, 1)).reshape(k * k, Co, Ci)

    # Flat layout: tap (ky, kx) of output flat-position f = h*Wp + w reads input
    # flat-position f + ky*d*Wp + kx*d  -> every tap is one contiguous lane slice.
    Lout = _round_up(H1 * Wp, 128)
    offsets = tuple(ky * d * Wp + kx * d for ky in range(k) for kx in range(k))
    Lin = _round_up(max(offsets) + Lout, 128)

    x_pad = jnp.pad(x, ((0, 0), (0, 0), (p, p), (p, p)))
    x_flat = x_pad.reshape(N, Ci, Hp * Wp)
    x_flat = jnp.pad(x_flat, ((0, 0), (0, 0), (0, Lin - Hp * Wp)))

    kernel = functools.partial(_dilconv_kernel, offsets=offsets)
    out_flat = pl.pallas_call(
        kernel,
        out_shape=jax.ShapeDtypeStruct((N, Co, Lout), x.dtype),
        grid_spec=pltpu.PrefetchScalarGridSpec(
            num_scalar_prefetch=0,
            grid=(N,),
            in_specs=[
                pl.BlockSpec((1, Ci, Lin), lambda i: (i, 0, 0)),
                pl.BlockSpec((k * k, Co, Ci), lambda i: (0, 0, 0)),
            ],
            out_specs=pl.BlockSpec((1, Co, Lout), lambda i: (i, 0, 0)),
        ),
        compiler_params=pltpu.CompilerParams(
            dimension_semantics=("parallel",)),
    )(x_flat, w_taps)

    # Drop padded-width junk columns, restore (N, C_out, H1, W1), apply stride by
    # exact subsampling of the stride-1 result.
    out = out_flat[:, :, :H1 * Wp].reshape(N, Co, H1, Wp)[:, :, :, :W1]
    return out[:, :, ::s, ::s]


def dilconv_ref(x, w_dw, w_pw, *, stride, padding, dilation):
    # Pure-JAX reference: grouped dilated conv then 1x1 conv (matches PyTorch).
    dn = ('NCHW', 'OIHW', 'NCHW')
    y = lax.conv_general_dilated(
        x, w_dw, window_strides=(stride, stride),
        padding=((padding, padding), (padding, padding)),
        rhs_dilation=(dilation, dilation),
        dimension_numbers=dn, feature_group_count=x.shape[1])
    y = lax.conv_general_dilated(
        y, w_pw, window_strides=(1, 1), padding='VALID',
        dimension_numbers=dn)
    return y


if __name__ == "__main__":
    # DilConv(C_in=4, C_out=8, kernel_size=3, stride=1, padding=2, dilation=2)
    N, C_in, C_out, H, W = 2, 4, 8, 16, 16
    kernel_size, stride, padding, dilation = 3, 1, 2, 2

    key = jax.random.PRNGKey(0)
    kx, kd, kp = jax.random.split(key, 3)
    x = jax.random.normal(kx, (N, C_in, H, W), jnp.float32)
    w_dw = jax.random.normal(kd, (C_in, 1, kernel_size, kernel_size),
                             jnp.float32) / math.sqrt(kernel_size * kernel_size)
    w_pw = jax.random.normal(kp, (C_out, C_in, 1, 1), jnp.float32) / math.sqrt(C_in)

    out = jax.block_until_ready(
        dilconv_pallas(x, w_dw, w_pw, stride=stride, padding=padding,
                       dilation=dilation))

    ref = dilconv_ref(x, w_dw, w_pw, stride=stride, padding=padding,
                      dilation=dilation)
    np.testing.assert_allclose(np.asarray(out), np.asarray(ref),
                               rtol=1e-4, atol=1e-4)
    print("KERNEL_OK")
</pallas_src>

<mosaic_0001>
module attributes {stable_mosaic.version = 11 : i64} {
  func.func @_dilconv_kernel(%arg0: i32, %arg1: memref<1x4x512xf32, #tpu.memory_space<vmem>>, %arg2: memref<9x8x4xf32, #tpu.memory_space<vmem>>, %arg3: memref<1x8x384xf32, #tpu.memory_space<vmem>>) attributes {dimension_semantics = [#tpu.dimension_semantics<parallel>], iteration_bounds = array<i64: 2>, scalar_prefetch = 0 : i64, scratch_operands = 0 : i64, tpu.core_type = #tpu.core_type<tc>, window_params = [{transform_indices = @transform_0, window_bounds = array<i64: 1, 4, 512>}, {pipeline_mode = #tpu.pipeline_mode<synchronous>, transform_indices = @transform_1, window_bounds = array<i64: 9, 8, 4>}, {transform_indices = @transform_2, window_bounds = array<i64: 1, 8, 384>}]} {
    %c0 = arith.constant 0 : index
    %c0_0 = arith.constant 0 : index
    %c0_1 = arith.constant 0 : index
    %0 = vector.load %arg1[%c0, %c0_0, %c0_1] : memref<1x4x512xf32, #tpu.memory_space<vmem>>, vector<1x4x512xf32>
    %1 = vector.shape_cast %0 : vector<1x4x512xf32> to vector<4x512xf32>
    %c0_2 = arith.constant 0 : index
    %c0_3 = arith.constant 0 : index
    %c0_4 = arith.constant 0 : index
    %2 = vector.load %arg2[%c0_2, %c0_3, %c0_4] : memref<9x8x4xf32, #tpu.memory_space<vmem>>, vector<9x8x4xf32>
    %3 = vector.extract_strided_slice %2 {offsets = [0, 0, 0], sizes = [1, 8, 4], strides = [1, 1, 1]} : vector<9x8x4xf32> to vector<1x8x4xf32>
    %4 = vector.shape_cast %3 : vector<1x8x4xf32> to vector<8x4xf32>
    %5 = vector.extract_strided_slice %1 {offsets = [0, 0], sizes = [4, 384], strides = [1, 1]} : vector<4x512xf32> to vector<4x384xf32>
    %cst = arith.constant dense<0.000000e+00> : vector<8x384xf32>
    %6 = tpu.matmul %4, %5, %cst {dimension_numbers = #tpu.dot_dimension_numbers<[1], [0], [0], [1], [0, 0, 1, 1], [], []>} : vector<8x4xf32>, vector<4x384xf32>, vector<8x384xf32> -> vector<8x384xf32>
    %7 = vector.extract_strided_slice %2 {offsets = [1, 0, 0], sizes = [1, 8, 4], strides = [1, 1, 1]} : vector<9x8x4xf32> to vector<1x8x4xf32>
    %8 = vector.shape_cast %7 : vector<1x8x4xf32> to vector<8x4xf32>
    %9 = vector.extract_strided_slice %1 {offsets = [0, 2], sizes = [4, 384], strides = [1, 1]} : vector<4x512xf32> to vector<4x384xf32>
    %cst_5 = arith.constant dense<0.000000e+00> : vector<8x384xf32>
    %10 = tpu.matmul %8, %9, %cst_5 {dimension_numbers = #tpu.dot_dimension_numbers<[1], [0], [0], [1], [0, 0, 1, 1], [], []>} : vector<8x4xf32>, vector<4x384xf32>, vector<8x384xf32> -> vector<8x384xf32>
    %11 = arith.addf %6, %10 : vector<8x384xf32>
    %12 = vector.extract_strided_slice %2 {offsets = [2, 0, 0], sizes = [1, 8, 4], strides = [1, 1, 1]} : vector<9x8x4xf32> to vector<1x8x4xf32>
    %13 = vector.shape_cast %12 : vector<1x8x4xf32> to vector<8x4xf32>
    %14 = vector.extract_strided_slice %1 {offsets = [0, 4], sizes = [4, 384], strides = [1, 1]} : vector<4x512xf32> to vector<4x384xf32>
    %cst_6 = arith.constant dense<0.000000e+00> : vector<8x384xf32>
    %15 = tpu.matmul %13, %14, %cst_6 {dimension_numbers = #tpu.dot_dimension_numbers<[1], [0], [0], [1], [0, 0, 1, 1], [], []>} : vector<8x4xf32>, vector<4x384xf32>, vector<8x384xf32> -> vector<8x384xf32>
    %16 = arith.addf %11, %15 : vector<8x384xf32>
    %17 = vector.extract_strided_slice %2 {offsets = [3, 0, 0], sizes = [1, 8, 4], strides = [1, 1, 1]} : vector<9x8x4xf32> to vector<1x8x4xf32>
    %18 = vector.shape_cast %17 : vector<1x8x4xf32> to vector<8x4xf32>
    %19 = vector.extract_strided_slice %1 {offsets = [0, 40], sizes = [4, 384], strides = [1, 1]} : vector<4x512xf32> to vector<4x384xf32>
    %cst_7 = arith.constant dense<0.000000e+00> : vector<8x384xf32>
    %20 = tpu.matmul %18, %19, %cst_7 {dimension_numbers = #tpu.dot_dimension_numbers<[1], [0], [0], [1], [0, 0, 1, 1], [], []>} : vector<8x4xf32>, vector<4x384xf32>, vector<8x384xf32> -> vector<8x384xf32>
    %21 = arith.addf %16, %20 : vector<8x384xf32>
    %22 = vector.extract_strided_slice %2 {offsets = [4, 0, 0], sizes = [1, 8, 4], strides = [1, 1, 1]} : vector<9x8x4xf32> to vector<1x8x4xf32>
    %23 = vector.shape_cast %22 : vector<1x8x4xf32> to vector<8x4xf32>
    %24 = vector.extract_strided_slice %1 {offsets = [0, 42], sizes = [4, 384], strides = [1, 1]} : vector<4x512xf32> to vector<4x384xf32>
    %cst_8 = arith.constant dense<0.000000e+00> : vector<8x384xf32>
    %25 = tpu.matmul %23, %24, %cst_8 {dimension_numbers = #tpu.dot_dimension_numbers<[1], [0], [0], [1], [0, 0, 1, 1], [], []>} : vector<8x4xf32>, vector<4x384xf32>, vector<8x384xf32> -> vector<8x384xf32>
    %26 = arith.addf %21, %25 : vector<8x384xf32>
    %27 = vector.extract_strided_slice %2 {offsets = [5, 0, 0], sizes = [1, 8, 4], strides = [1, 1, 1]} : vector<9x8x4xf32> to vector<1x8x4xf32>
    %28 = vector.shape_cast %27 : vector<1x8x4xf32> to vector<8x4xf32>
    %29 = vector.extract_strided_slice %1 {offsets = [0, 44], sizes = [4, 384], strides = [1, 1]} : vector<4x512xf32> to vector<4x384xf32>
    %cst_9 = arith.constant dense<0.000000e+00> : vector<8x384xf32>
    %30 = tpu.matmul %28, %29, %cst_9 {dimension_numbers = #tpu.dot_dimension_numbers<[1], [0], [0], [1], [0, 0, 1, 1], [], []>} : vector<8x4xf32>, vector<4x384xf32>, vector<8x384xf32> -> vector<8x384xf32>
    %31 = arith.addf %26, %30 : vector<8x384xf32>
    %32 = vector.extract_strided_slice %2 {offsets = [6, 0, 0], sizes = [1, 8, 4], strides = [1, 1, 1]} : vector<9x8x4xf32> to vector<1x8x4xf32>
    %33 = vector.shape_cast %32 : vector<1x8x4xf32> to vector<8x4xf32>
    %34 = vector.extract_strided_slice %1 {offsets = [0, 80], sizes = [4, 384], strides = [1, 1]} : vector<4x512xf32> to vector<4x384xf32>
    %cst_10 = arith.constant dense<0.000000e+00> : vector<8x384xf32>
    %35 = tpu.matmul %33, %34, %cst_10 {dimension_numbers = #tpu.dot_dimension_numbers<[1], [0], [0], [1], [0, 0, 1, 1], [], []>} : vector<8x4xf32>, vector<4x384xf32>, vector<8x384xf32> -> vector<8x384xf32>
    %36 = arith.addf %31, %35 : vector<8x384xf32>
    %37 = vector.extract_strided_slice %2 {offsets = [7, 0, 0], sizes = [1, 8, 4], strides = [1, 1, 1]} : vector<9x8x4xf32> to vector<1x8x4xf32>
    %38 = vector.shape_cast %37 : vector<1x8x4xf32> to vector<8x4xf32>
    %39 = vector.extract_strided_slice %1 {offsets = [0, 82], sizes = [4, 384], strides = [1, 1]} : vector<4x512xf32> to vector<4x384xf32>
    %cst_11 = arith.constant dense<0.000000e+00> : vector<8x384xf32>
    %40 = tpu.matmul %38, %39, %cst_11 {dimension_numbers = #tpu.dot_dimension_numbers<[1], [0], [0], [1], [0, 0, 1, 1], [], []>} : vector<8x4xf32>, vector<4x384xf32>, vector<8x384xf32> -> vector<8x384xf32>
    %41 = arith.addf %36, %40 : vector<8x384xf32>
    %42 = vector.extract_strided_slice %2 {offsets = [8, 0, 0], sizes = [1, 8, 4], strides = [1, 1, 1]} : vector<9x8x4xf32> to vector<1x8x4xf32>
    %43 = vector.shape_cast %42 : vector<1x8x4xf32> to vector<8x4xf32>
    %44 = vector.extract_strided_slice %1 {offsets = [0, 84], sizes = [4, 384], strides = [1, 1]} : vector<4x512xf32> to vector<4x384xf32>
    %cst_12 = arith.constant dense<0.000000e+00> : vector<8x384xf32>
    %45 = tpu.matmul %43, %44, %cst_12 {dimension_numbers = #tpu.dot_dimension_numbers<[1], [0], [0], [1], [0, 0, 1, 1], [], []>} : vector<8x4xf32>, vector<4x384xf32>, vector<8x384xf32> -> vector<8x384xf32>
    %46 = arith.addf %41, %45 : vector<8x384xf32>
    %c0_13 = arith.constant 0 : index
    %c0_14 = arith.constant 0 : index
    %c0_15 = arith.constant 0 : index
    %47 = vector.load %arg3[%c0_13, %c0_14, %c0_15] : memref<1x8x384xf32, #tpu.memory_space<vmem>>, vector<1x8x384xf32>
    %48 = vector.shape_cast %47 : vector<1x8x384xf32> to vector<8x384xf32>
    %49 = vector.shape_cast %46 : vector<8x384xf32> to vector<1x8x384xf32>
    tpu.vector_store %arg3[%c0_13, %c0_14, %c0_15], %49 {strides = array<i32>} : memref<1x8x384xf32, #tpu.memory_space<vmem>>, vector<1x8x384xf32>,
    return
  }
  func.func @transform_0(%arg0: i32) -> (i32, i32, i32) {
    %c0_i32 = arith.constant 0 : i32
    %c0_i32_0 = arith.constant 0 : i32
    %c0_i32_1 = arith.constant 0 : i32
    return %arg0, %c0_i32, %c0_i32_0 : i32, i32, i32
  }
  func.func @transform_1(%arg0: i32) -> (i32, i32, i32) {
    %c0_i32 = arith.constant 0 : i32
    %c0_i32_0 = arith.constant 0 : i32
    %c0_i32_1 = arith.constant 0 : i32
    %c0_i32_2 = arith.constant 0 : i32
    return %c0_i32, %c0_i32_0, %c0_i32_1 : i32, i32, i32
  }
  func.func @transform_2(%arg0: i32) -> (i32, i32, i32) {
    %c0_i32 = arith.constant 0 : i32
    %c0_i32_0 = arith.constant 0 : i32
    %c0_i32_1 = arith.constant 0 : i32
    return %arg0, %c0_i32, %c0_i32_0 : i32, i32, i32
  }
}

</mosaic_0001>

<llo_original>
// kernel: tpu_custom_call.1
$region0: #{tpu_custom_call.1}
  #allocation0 [shape = 'u32[]', space=smem, size = 0x4, offset = 0x4, fixed_abs, tag = 'smem constant byte address 0x4 - core index']
  #allocation1 [shape = 'u32[72,128]{1,0:T(1,128)}', space=vmem, size = 0x9000, scoped, tag = 'internal scratch']
  %s0 = inlined_call_operand.vmem [shape: f32[2,4,512], index: 0, kind: input, shape index: {}]
  %s1 = inlined_call_operand.vmem [shape: f32[9,8,4], index: 1, kind: input, shape index: {}]
  %s2 = inlined_call_operand.hbm [shape: f32[2,8,384], index: 2, kind: output, shape index: {}]
  %s3 = sld [smem:[#allocation0]]
  $region41: #{tpu_custom_call.1} parent=0
    _
  %s5 = ssub.s32 1, %s3
  %s6 = scalar_select 0, %s5, %s3
  $region1: #{tpu_custom_call.1} parent=0
    #allocation2 [shape = 'u8[24576]{0}', space=vmem, size = 0x6000, scoped, tag = 'output window, operand 0']
    #allocation3 [shape = 's32[2]{0}', space=sflag, size = 0x8, scoped, tag = 'scoped memory for tpu_custom_call.1']
    %7 = vsyncpa [#allocation3], 0
    %s8 = scalar_lea.sflag [#allocation3], 1
    %9 = vsyncpa %s8, 0
    loop: start=0, step=1, limit=4
    $region2: #{tpu_custom_call.1} parent=1 // loop_pre_header
      _
    $region3: #{tpu_custom_call.1} parent=1 // loop_header
      %s11 = sphi 0, %s15
      %p12 = scmp.ge.s32.totalorder %s11, 4
      %s21 = sphi 0, %s23
      %s24 = sphi 0, %s21
      %s25 = sphi 0, %s24
      %s41 = sphi 0, %s25
      %s45 = sphi 0, %s45
      %s47 = sphi 0, %s45
      %s48 = sphi 0, %s47
      %s62 = sphi 0, %s48
      %s68 = sphi 0, %s70
      %s71 = sphi 0, %s68
      %s72 = sphi 0, %s71
      %s88 = sphi 0, %s72
    $region4: #{tpu_custom_call.1} parent=1 // loop_header_branch
      %14 = sbr.rel (%p12) target = $region8
    $region5: #{tpu_custom_call.1} parent=1 // loop_body
      %s16 = ssub.s32 %s11, 1
      %s17 = ssub.s32 %s11, 2
      %s18 = sadd.s32 %s11, 1
      %s19 = ssub.s32 %s11, %s18
      %p20 = scmp.eq.s32.totalorder %s19, 0
      %s22 = sadd.s32 %s21, 1
      %s23 = scalar_select %p20, %s21, %s22
      %p26 = pneg %p20
      %p27 = scmp.eq.s32.totalorder %s11, 1
      %p28 = por %p26, %p27
      %p29 = scmp.ne.s32.totalorder %s21, %s24
      %p30 = scmp.eq.s32.totalorder %s11, 0
      %p31 = por %p29, %p30
      %p32 = scmp.ne.s32.totalorder %s21, %s24
      %p33 = scmp.eq.s32.totalorder %s16, 1
      %p34 = por %p32, %p33
      %p35 = scmp.ne.s32.totalorder %s24, %s25
      %p36 = scmp.eq.s32.totalorder %s16, 0
      %p37 = por %p35, %p36
      %p38 = scmp.ne.s32.totalorder %s24, %s25
      %p39 = scmp.eq.s32.totalorder %s17, 1
      %p40 = por %p38, %p39
      %p42 = scmp.ne.s32.totalorder %s25, %s41
      %p43 = scmp.eq.s32.totalorder %s17, 0
      %p44 = por %p42, %p43
      %s46 = sadd.s32 %s45, 1
      %p49 = scmp.eq.s32.totalorder %s11, 1
      %p50 = scmp.ne.s32.totalorder %s45, %s47
      %p51 = scmp.eq.s32.totalorder %s11, 0
      %p52 = por %p50, %p51
      %p53 = scmp.ne.s32.totalorder %s45, %s47
      %p54 = scmp.eq.s32.totalorder %s16, 1
      %p55 = por %p53, %p54
      %p56 = scmp.ne.s32.totalorder %s47, %s48
      %p57 = scmp.eq.s32.totalorder %s16, 0
      %p58 = por %p56, %p57
      %p59 = scmp.ne.s32.totalorder %s47, %s48
      %p60 = scmp.eq.s32.totalorder %s17, 1
      %p61 = por %p59, %p60
      %p63 = scmp.ne.s32.totalorder %s48, %s62
      %p64 = scmp.eq.s32.totalorder %s17, 0
      %p65 = por %p63, %p64
      %s66 = ssub.s32 %s11, %s18
      %p67 = scmp.eq.s32.totalorder %s66, 0
      %s69 = sadd.s32 %s68, 1
      %s70 = scalar_select %p67, %s68, %s69
      %p73 = pneg %p67
      %p74 = scmp.eq.s32.totalorder %s11, 1
      %p75 = por %p73, %p74
      %p76 = scmp.ne.s32.totalorder %s68, %s71
      %p77 = scmp.eq.s32.totalorder %s11, 0
      %p78 = por %p76, %p77
      %p79 = scmp.ne.s32.totalorder %s68, %s71
      %p80 = scmp.eq.s32.totalorder %s16, 1
      %p81 = por %p79, %p80
      %p82 = scmp.ne.s32.totalorder %s71, %s72
      %p83 = scmp.eq.s32.totalorder %s16, 0
      %p84 = por %p82, %p83
      %p85 = scmp.ne.s32.totalorder %s71, %s72
      %p86 = scmp.eq.s32.totalorder %s17, 1
      %p87 = por %p85, %p86
      %p89 = scmp.ne.s32.totalorder %s72, %s88
      %p90 = scmp.eq.s32.totalorder %s17, 0
      %p91 = por %p89, %p90
      %p92 = scmp.le.s32.totalorder 1, %s11
      %p93 = scmp.lt.s32.totalorder %s11, 3
      %p94 = pnand %p92, %p93
      %p95 = pneg %p94
      // Predicated region
      $region9: #{tpu_custom_call.1} parent=5 // pred_check
        _
      $region10: #{tpu_custom_call.1} parent=5 // pred_check_branch
        %97 = sbr.rel (%p94) target = $region12
      $region11: #{tpu_custom_call.1} parent=5 // pred_region
        %s98 = ssub.s32 %s11, 1
        // Predicated region
        $region13: #{tpu_custom_call.1} parent=11 // pred_check
          %p99 = pneg %p58
        $region14: #{tpu_custom_call.1} parent=11 // pred_check_branch
          %101 = sbr.rel (%p99) target = $region16
        $region15: #{tpu_custom_call.1} parent=11 // pred_region
          _
        $region16: #{tpu_custom_call.1} parent=11 // pred_fallthru
          _
      $region12: #{tpu_custom_call.1} parent=5 // pred_fallthru
        _
      %p102 = scmp.lt.s32.totalorder %s11, 2
      // Predicated region
      $region17: #{tpu_custom_call.1} parent=5 // pred_check
        %p103 = pneg %p102
      $region18: #{tpu_custom_call.1} parent=5 // pred_check_branch
        %105 = sbr.rel (%p103) target = $region20
      $region19: #{tpu_custom_call.1} parent=5 // pred_region
        // Predicated region
        $region21: #{tpu_custom_call.1} parent=19 // pred_check
          %p106 = pneg %p31
        $region22: #{tpu_custom_call.1} parent=19 // pred_check_branch
          %108 = sbr.rel (%p106) target = $region24
        $region23: #{tpu_custom_call.1} parent=19 // pred_region
          %p109 = scmp.lt.s32.totalorder %s11, 1
          %s110 = scalar_select %p109, %s11, 1
          %s111 = smul.addr %s110, 4
          %s112 = smul.addr %s111, 4
          %s113 = scalar_lea.vmem %s0, %s112
        $region24: #{tpu_custom_call.1} parent=19 // pred_fallthru
          _
      $region20: #{tpu_custom_call.1} parent=5 // pred_fallthru
        _
      %p114 = scmp.le.s32.totalorder 1, %s11
      %p115 = scmp.lt.s32.totalorder %s11, 3
      %p116 = pnand %p114, %p115
      %p117 = pneg %p116
      // Predicated region
      $region25: #{tpu_custom_call.1} parent=5 // pred_check
        _
      $region26: #{tpu_custom_call.1} parent=5 // pred_check_branch
        %119 = sbr.rel (%p116) target = $region28
      $region27: #{tpu_custom_call.1} parent=5 // pred_region
        %s120 = ssub.s32 %s11, 1
        %p121 = scmp.lt.s32.totalorder %s16, 1
        %s122 = scalar_select %p121, %s16, 1
        %s123 = smul.addr %s122, 4
        %s124 = smul.addr %s123, 4
        %s125 = scalar_lea.vmem %s0, %s124
        %p126 = pneg %p37
        %p127 = pneg %p34
        %p128 = pneg %p58
        %p129 = pneg %p55
        %p130 = pneg %p84
        %p131 = pneg %p81
        %s132 = sand.u32 %s71, 1
        %s133 = scalar_lea.sflag [#allocation3], %s132
        %s134 = sand.u32 %s71, 1
        %s135 = smul.addr %s134, 24
        %s136 = scalar_lea.vmem [#allocation2], %s135
        %p137 = scmp.lt.s32.totalorder %s16, 1
        %s138 = scalar_select %p137, %s16, 1
        %s139 = smul.addr %s138, 4
        %s140 = smul.addr %s139, 4
        %s141 = scalar_lea.vmem %s0, %s140
        %v142 = vld [vmem:[%s141] sm:$0xff]
        %v143 = vld [vmem:[%s141 + $0x8] sm:$0xff]
        %v144 = vld [vmem:[%s1] sm:$0xff]
        %v145 = vld [vmem:[%s1 + $0x8] sm:$0xff]
        %v146 = vld [vmem:[%s1 + $0x10] sm:$0xff]
        %v147 = vld [vmem:[%s1 + $0x18] sm:$0xff]
        %v148 = vld [vmem:[%s1 + $0x20] sm:$0xff]
        %v149 = vld [vmem:[%s1 + $0x28] sm:$0xff]
        %v150 = vld [vmem:[%s1 + $0x30] sm:$0xff]
        %v151 = vld [vmem:[%s1 + $0x38] sm:$0xff]
        %v152 = vld [vmem:[%s1 + $0x40] sm:$0xff]
        %155 = vst [vmem:[#allocation1] ss:$2 sm:$0xff] %v142
        %s156 = scalar_lea.vmem [#allocation1], 16
        %157 = vst [vmem:[%s156] ss:$2 sm:$0xff] %v143
        %v158 = vld.sshfl [vmem:[#allocation1] sm:$0xff pattern:$0x75316420]
        %v159 = vld.sshfl [vmem:[#allocation1 + $0x8] sm:$0xff pattern:$0x75316420]
        %v160 = vld.sshfl [vmem:[#allocation1 + $0x10] sm:$0xff pattern:$0x75316420]
        %v161 = vld.sshfl [vmem:[#allocation1 + $0x18] sm:$0xff pattern:$0x75316420]
        %162 = vrot.lane.b32.xlu0 %v158, 126
        %v163 = vpop.permute.xlu0 %162
        %164 = vrot.lane.b32.xlu0 %v159, 126
        %v165 = vpop.permute.xlu0 %164
        %166 = vrot.lane.b32.xlu0 %v160, 126
        %v167 = vpop.permute.xlu0 %166
        %168 = vrot.lane.b32.xlu0 %v161, 126
        %v169 = vpop.permute.xlu0 %168
        %vm170 = vcmask 1031168
        %v171 = vsel %vm170, %v163, %v165
        %v172 = vsel %vm170, %v165, %v167
        %v173 = vsel %vm170, %v167, %v169
        %vm174 = vcmask 31744
        %v176 = vsel %vm174, %v145, 0
        %vm178 = vcmask 1043456
        %v179 = vsel %vm178, %v171, 0
        %v181 = vsel %vm178, %v172, 0
        %v183 = vsel %vm178, %v173, 0
        %185 = vmatpush.msra.mxu0 0.0
        %186 = vmatpush.msra.mxu0 0.0
        %187 = vmatpush.msra.mxu0 0.0
        %188 = vmatpush.msra.mxu0 0.0
        %189 = vmatpush.msra.mxu0 0.0
        %190 = vmatpush.msra.mxu0 0.0
        %191 = vmatpush.msra.mxu0 0.0
        %192 = vmatpush.msra.mxu0 0.0
        %193 = vmatpush.msra.mxu0 0.0
        %194 = vmatpush.msra.mxu0 0.0
        %195 = vmatpush.msra.mxu0 0.0
        %196 = vmatpush.msra.mxu0 0.0
        %197 = vmatpush.msra.mxu0 0.0
        %198 = vmatpush.msra.mxu0 0.0
        %199 = vmatpush.msra.mxu0 0.0
        %200 = vmatpush.msra.mxu0 %v179
        %201 = vmatmul.f32.gmra.mxu0 %v176
        %v202 = vpop.f32.mrf.mxu0
        %v203 = vadd.f32 0.0, %v202
        %204 = vdwg.mxu0
        %205 = vmatpush.msra.mxu0 0.0
        %206 = vmatpush.msra.mxu0 0.0
        %207 = vmatpush.msra.mxu0 0.0
        %208 = vmatpush.msra.mxu0 0.0
        %209 = vmatpush.msra.mxu0 0.0
        %210 = vmatpush.msra.mxu0 0.0
        %211 = vmatpush.msra.mxu0 0.0
        %212 = vmatpush.msra.mxu0 0.0
        %213 = vmatpush.msra.mxu0 0.0
        %214 = vmatpush.msra.mxu0 0.0
        %215 = vmatpush.msra.mxu0 0.0
        %216 = vmatpush.msra.mxu0 0.0
        %217 = vmatpush.msra.mxu0 0.0
        %218 = vmatpush.msra.mxu0 0.0
        %219 = vmatpush.msra.mxu0 0.0
        %220 = vmatpush.msra.mxu0 %v181
        %221 = vmatmul.f32.gmra.mxu0 %v176
        %v222 = vpop.f32.mrf.mxu0
        %v223 = vadd.f32 0.0, %v222
        %224 = vdwg.mxu0
        %225 = vmatpush.msra.mxu0 0.0
        %226 = vmatpush.msra.mxu0 0.0
        %227 = vmatpush.msra.mxu0 0.0
        %228 = vmatpush.msra.mxu0 0.0
        %229 = vmatpush.msra.mxu0 0.0
        %230 = vmatpush.msra.mxu0 0.0
        %231 = vmatpush.msra.mxu0 0.0
        %232 = vmatpush.msra.mxu0 0.0
        %233 = vmatpush.msra.mxu0 0.0
        %234 = vmatpush.msra.mxu0 0.0
        %235 = vmatpush.msra.mxu0 0.0
        %236 = vmatpush.msra.mxu0 0.0
        %237 = vmatpush.msra.mxu0 0.0
        %238 = vmatpush.msra.mxu0 0.0
        %239 = vmatpush.msra.mxu0 0.0
        %240 = vmatpush.msra.mxu0 %v183
        %241 = vmatmul.f32.gmra.mxu0 %v176
        %v242 = vpop.f32.mrf.mxu0
        %v243 = vadd.f32 0.0, %v242
        %244 = vdwg.mxu0
        %245 = vst [vmem:[#allocation1] ss:$2 sm:$0xff] %v142
        %s246 = scalar_lea.vmem [#allocation1], 16
        %247 = vst [vmem:[%s246] ss:$2 sm:$0xff] %v143
        %v248 = vld.sshfl [vmem:[#allocation1] sm:$0xff pattern:$0x75316420]
        %v249 = vld.sshfl [vmem:[#allocation1 + $0x8] sm:$0xff pattern:$0x75316420]
        %v250 = vld.sshfl [vmem:[#allocation1 + $0x10] sm:$0xff pattern:$0x75316420]
        %v252 = vsel %vm174, %v144, 0
        %v254 = vsel %vm178, %v248, 0
        %v256 = vsel %vm178, %v249, 0
        %v258 = vsel %vm178, %v250, 0
        %260 = vmatpush.msra.mxu0 0.0
        %261 = vmatpush.msra.mxu0 0.0
        %262 = vmatpush.msra.mxu0 0.0
        %263 = vmatpush.msra.mxu0 0.0
        %264 = vmatpush.msra.mxu0 0.0
        %265 = vmatpush.msra.mxu0 0.0
        %266 = vmatpush.msra.mxu0 0.0
        %267 = vmatpush.msra.mxu0 0.0
        %268 = vmatpush.msra.mxu0 0.0
        %269 = vmatpush.msra.mxu0 0.0
        %270 = vmatpush.msra.mxu0 0.0
        %271 = vmatpush.msra.mxu0 0.0
        %272 = vmatpush.msra.mxu0 0.0
        %273 = vmatpush.msra.mxu0 0.0
        %274 = vmatpush.msra.mxu0 0.0
        %275 = vmatpush.msra.mxu0 %v254
        %276 = vmatmul.f32.gmra.mxu0 %v252
        %v277 = vpop.f32.mrf.mxu0
        %v278 = vadd.f32 %v203, %v277
        %279 = vdwg.mxu0
        %280 = vmatpush.msra.mxu0 0.0
        %281 = vmatpush.msra.mxu0 0.0
        %282 = vmatpush.msra.mxu0 0.0
        %283 = vmatpush.msra.mxu0 0.0
        %284 = vmatpush.msra.mxu0 0.0
        %285 = vmatpush.msra.mxu0 0.0
        %286 = vmatpush.msra.mxu0 0.0
        %287 = vmatpush.msra.mxu0 0.0
        %288 = vmatpush.msra.mxu0 0.0
        %289 = vmatpush.msra.mxu0 0.0
        %290 = vmatpush.msra.mxu0 0.0
        %291 = vmatpush.msra.mxu0 0.0
        %292 = vmatpush.msra.mxu0 0.0
        %293 = vmatpush.msra.mxu0 0.0
        %294 = vmatpush.msra.mxu0 0.0
        %295 = vmatpush.msra.mxu0 %v256
        %296 = vmatmul.f32.gmra.mxu0 %v252
        %v297 = vpop.f32.mrf.mxu0
        %v298 = vadd.f32 %v223, %v297
        %299 = vdwg.mxu0
        %300 = vmatpush.msra.mxu0 0.0
        %301 = vmatpush.msra.mxu0 0.0
        %302 = vmatpush.msra.mxu0 0.0
        %303 = vmatpush.msra.mxu0 0.0
        %304 = vmatpush.msra.mxu0 0.0
        %305 = vmatpush.msra.mxu0 0.0
        %306 = vmatpush.msra.mxu0 0.0
        %307 = vmatpush.msra.mxu0 0.0
        %308 = vmatpush.msra.mxu0 0.0
        %309 = vmatpush.msra.mxu0 0.0
        %310 = vmatpush.msra.mxu0 0.0
        %311 = vmatpush.msra.mxu0 0.0
        %312 = vmatpush.msra.mxu0 0.0
        %313 = vmatpush.msra.mxu0 0.0
        %314 = vmatpush.msra.mxu0 0.0
        %315 = vmatpush.msra.mxu0 %v258
        %316 = vmatmul.f32.gmra.mxu0 %v252
        %v317 = vpop.f32.mrf.mxu0
        %v318 = vadd.f32 %v243, %v317
        %319 = vdwg.mxu0
        %320 = vst [vmem:[#allocation1] ss:$2 sm:$0xff] %v142
        %s321 = scalar_lea.vmem [#allocation1], 16
        %322 = vst [vmem:[%s321] ss:$2 sm:$0xff] %v143
        %v323 = vld.sshfl [vmem:[#allocation1] sm:$0xff pattern:$0x75316420]
        %v324 = vld.sshfl [vmem:[#allocation1 + $0x8] sm:$0xff pattern:$0x75316420]
        %v325 = vld.sshfl [vmem:[#allocation1 + $0x10] sm:$0xff pattern:$0x75316420]
        %v326 = vld.sshfl [vmem:[#allocation1 + $0x18] sm:$0xff pattern:$0x75316420]
        %327 = vrot.lane.b32.xlu0 %v323, 124
        %v328 = vpop.permute.xlu0 %327
        %329 = vrot.lane.b32.xlu0 %v324, 124
        %v330 = vpop.permute.xlu0 %329
        %331 = vrot.lane.b32.xlu0 %v325, 124
        %v332 = vpop.permute.xlu0 %331
        %333 = vrot.lane.b32.xlu0 %v326, 124
        %v334 = vpop.permute.xlu0 %333
        %vm335 = vcmask 1014784
        %v336 = vsel %vm335, %v328, %v330
        %v337 = vsel %vm335, %v330, %v332
        %v338 = vsel %vm335, %v332, %v334
        %v340 = vsel %vm174, %v146, 0
        %v342 = vsel %vm178, %v336, 0
        %v344 = vsel %vm178, %v337, 0
        %v346 = vsel %vm178, %v338, 0
        %348 = vmatpush.msra.mxu0 0.0
        %349 = vmatpush.msra.mxu0 0.0
        %350 = vmatpush.msra.mxu0 0.0
        %351 = vmatpush.msra.mxu0 0.0
        %352 = vmatpush.msra.mxu0 0.0
        %353 = vmatpush.msra.mxu0 0.0
        %354 = vmatpush.msra.mxu0 0.0
        %355 = vmatpush.msra.mxu0 0.0
        %356 = vmatpush.msra.mxu0 0.0
        %357 = vmatpush.msra.mxu0 0.0
        %358 = vmatpush.msra.mxu0 0.0
        %359 = vmatpush.msra.mxu0 0.0
        %360 = vmatpush.msra.mxu0 0.0
        %361 = vmatpush.msra.mxu0 0.0
        %362 = vmatpush.msra.mxu0 0.0
        %363 = vmatpush.msra.mxu0 %v342
        %364 = vmatmul.f32.gmra.mxu0 %v340
        %v365 = vpop.f32.mrf.mxu0
        %v366 = vadd.f32 0.0, %v365
        %367 = vdwg.mxu0
        %368 = vmatpush.msra.mxu0 0.0
        %369 = vmatpush.msra.mxu0 0.0
        %370 = vmatpush.msra.mxu0 0.0
        %371 = vmatpush.msra.mxu0 0.0
        %372 = vmatpush.msra.mxu0 0.0
        %373 = vmatpush.msra.mxu0 0.0
        %374 = vmatpush.msra.mxu0 0.0
        %375 = vmatpush.msra.mxu0 0.0
        %376 = vmatpush.msra.mxu0 0.0
        %377 = vmatpush.msra.mxu0 0.0
        %378 = vmatpush.msra.mxu0 0.0
        %379 = vmatpush.msra.mxu0 0.0
        %380 = vmatpush.msra.mxu0 0.0
        %381 = vmatpush.msra.mxu0 0.0
        %382 = vmatpush.msra.mxu0 0.0
        %383 = vmatpush.msra.mxu0 %v344
        %384 = vmatmul.f32.gmra.mxu0 %v340
        %v385 = vpop.f32.mrf.mxu0
        %v386 = vadd.f32 0.0, %v385
        %387 = vdwg.mxu0
        %388 = vmatpush.msra.mxu0 0.0
        %389 = vmatpush.msra.mxu0 0.0
        %390 = vmatpush.msra.mxu0 0.0
        %391 = vmatpush.msra.mxu0 0.0
        %392 = vmatpush.msra.mxu0 0.0
        %393 = vmatpush.msra.mxu0 0.0
        %394 = vmatpush.msra.mxu0 0.0
        %395 = vmatpush.msra.mxu0 0.0
        %396 = vmatpush.msra.mxu0 0.0
        %397 = vmatpush.msra.mxu0 0.0
        %398 = vmatpush.msra.mxu0 0.0
        %399 = vmatpush.msra.mxu0 0.0
        %400 = vmatpush.msra.mxu0 0.0
        %401 = vmatpush.msra.mxu0 0.0
        %402 = vmatpush.msra.mxu0 0.0
        %403 = vmatpush.msra.mxu0 %v346
        %404 = vmatmul.f32.gmra.mxu0 %v340
        %v405 = vpop.f32.mrf.mxu0
        %v406 = vadd.f32 0.0, %v405
        %407 = vdwg.mxu0
        %v408 = vadd.f32 %v278, %v366
        %v409 = vadd.f32 %v298, %v386
        %v410 = vadd.f32 %v318, %v406
        %411 = vst [vmem:[#allocation1] ss:$2 sm:$0xff] %v142
        %s412 = scalar_lea.vmem [#allocation1], 16
        %413 = vst [vmem:[%s412] ss:$2 sm:$0xff] %v143
        %v414 = vld.sshfl [vmem:[#allocation1] sm:$0xff pattern:$0x75316420]
        %v415 = vld.sshfl [vmem:[#allocation1 + $0x8] sm:$0xff pattern:$0x75316420]
        %v416 = vld.sshfl [vmem:[#allocation1 + $0x10] sm:$0xff pattern:$0x75316420]
        %v417 = vld.sshfl [vmem:[#allocation1 + $0x18] sm:$0xff pattern:$0x75316420]
        %418 = vrot.lane.b32.xlu0 %v414, 88
        %v419 = vpop.permute.xlu0 %418
        %420 = vrot.lane.b32.xlu0 %v415, 88
        %v421 = vpop.permute.xlu0 %420
        %422 = vrot.lane.b32.xlu0 %v416, 88
        %v423 = vpop.permute.xlu0 %422
        %424 = vrot.lane.b32.xlu0 %v417, 88
        %v425 = vpop.permute.xlu0 %424
        %vm426 = vcmask 719872
        %v427 = vsel %vm426, %v419, %v421
        %v428 = vsel %vm426, %v421, %v423
        %v429 = vsel %vm426, %v423, %v425
        %v431 = vsel %vm174, %v147, 0
        %v433 = vsel %vm178, %v427, 0
        %v435 = vsel %vm178, %v428, 0
        %v437 = vsel %vm178, %v429, 0
        %439 = vmatpush.msra.mxu0 0.0
        %440 = vmatpush.msra.mxu0 0.0
        %441 = vmatpush.msra.mxu0 0.0
        %442 = vmatpush.msra.mxu0 0.0
        %443 = vmatpush.msra.mxu0 0.0
        %444 = vmatpush.msra.mxu0 0.0
        %445 = vmatpush.msra.mxu0 0.0
        %446 = vmatpush.msra.mxu0 0.0
        %447 = vmatpush.msra.mxu0 0.0
        %448 = vmatpush.msra.mxu0 0.0
        %449 = vmatpush.msra.mxu0 0.0
        %450 = vmatpush.msra.mxu0 0.0
        %451 = vmatpush.msra.mxu0 0.0
        %452 = vmatpush.msra.mxu0 0.0
        %453 = vmatpush.msra.mxu0 0.0
        %454 = vmatpush.msra.mxu0 %v433
        %455 = vmatmul.f32.gmra.mxu0 %v431
        %v456 = vpop.f32.mrf.mxu0
        %v457 = vadd.f32 0.0, %v456
        %458 = vdwg.mxu0
        %459 = vmatpush.msra.mxu0 0.0
        %460 = vmatpush.msra.mxu0 0.0
        %461 = vmatpush.msra.mxu0 0.0
        %462 = vmatpush.msra.mxu0 0.0
        %463 = vmatpush.msra.mxu0 0.0
        %464 = vmatpush.msra.mxu0 0.0
        %465 = vmatpush.msra.mxu0 0.0
        %466 = vmatpush.msra.mxu0 0.0
        %467 = vmatpush.msra.mxu0 0.0
        %468 = vmatpush.msra.mxu0 0.0
        %469 = vmatpush.msra.mxu0 0.0
        %470 = vmatpush.msra.mxu0 0.0
        %471 = vmatpush.msra.mxu0 0.0
        %472 = vmatpush.msra.mxu0 0.0
        %473 = vmatpush.msra.mxu0 0.0
        %474 = vmatpush.msra.mxu0 %v435
        %475 = vmatmul.f32.gmra.mxu0 %v431
        %v476 = vpop.f32.mrf.mxu0
        %v477 = vadd.f32 0.0, %v476
        %478 = vdwg.mxu0
        %479 = vmatpush.msra.mxu0 0.0
        %480 = vmatpush.msra.mxu0 0.0
        %481 = vmatpush.msra.mxu0 0.0
        %482 = vmatpush.msra.mxu0 0.0
        %483 = vmatpush.msra.mxu0 0.0
        %484 = vmatpush.msra.mxu0 0.0
        %485 = vmatpush.msra.mxu0 0.0
        %486 = vmatpush.msra.mxu0 0.0
        %487 = vmatpush.msra.mxu0 0.0
        %488 = vmatpush.msra.mxu0 0.0
        %489 = vmatpush.msra.mxu0 0.0
        %490 = vmatpush.msra.mxu0 0.0
        %491 = vmatpush.msra.mxu0 0.0
        %492 = vmatpush.msra.mxu0 0.0
        %493 = vmatpush.msra.mxu0 0.0
        %494 = vmatpush.msra.mxu0 %v437
        %495 = vmatmul.f32.gmra.mxu0 %v431
        %v496 = vpop.f32.mrf.mxu0
        %v497 = vadd.f32 0.0, %v496
        %498 = vdwg.mxu0
        %v499 = vadd.f32 %v408, %v457
        %v500 = vadd.f32 %v409, %v477
        %v501 = vadd.f32 %v410, %v497
        %502 = vst [vmem:[#allocation1] ss:$2 sm:$0xff] %v142
        %s503 = scalar_lea.vmem [#allocation1], 16
        %504 = vst [vmem:[%s503] ss:$2 sm:$0xff] %v143
        %v505 = vld.sshfl [vmem:[#allocation1] sm:$0xff pattern:$0x75316420]
        %v506 = vld.sshfl [vmem:[#allocation1 + $0x8] sm:$0xff pattern:$0x75316420]
        %v507 = vld.sshfl [vmem:[#allocation1 + $0x10] sm:$0xff pattern:$0x75316420]
        %v508 = vld.sshfl [vmem:[#allocation1 + $0x18] sm:$0xff pattern:$0x75316420]
        %509 = vrot.lane.b32.xlu0 %v505, 86
        %v510 = vpop.permute.xlu0 %509
        %511 = vrot.lane.b32.xlu0 %v506, 86
        %v512 = vpop.permute.xlu0 %511
        %513 = vrot.lane.b32.xlu0 %v507, 86
        %v514 = vpop.permute.xlu0 %513
        %515 = vrot.lane.b32.xlu0 %v508, 86
        %v516 = vpop.permute.xlu0 %515
        %vm517 = vcmask 703488
        %v518 = vsel %vm517, %v510, %v512
        %v519 = vsel %vm517, %v512, %v514
        %v520 = vsel %vm517, %v514, %v516
        %v522 = vsel %vm174, %v148, 0
        %v524 = vsel %vm178, %v518, 0
        %v526 = vsel %vm178, %v519, 0
        %v528 = vsel %vm178, %v520, 0
        %530 = vmatpush.msra.mxu0 0.0
        %531 = vmatpush.msra.mxu0 0.0
        %532 = vmatpush.msra.mxu0 0.0
        %533 = vmatpush.msra.mxu0 0.0
        %534 = vmatpush.msra.mxu0 0.0
        %535 = vmatpush.msra.mxu0 0.0
        %536 = vmatpush.msra.mxu0 0.0
        %537 = vmatpush.msra.mxu0 0.0
        %538 = vmatpush.msra.mxu0 0.0
        %539 = vmatpush.msra.mxu0 0.0
        %540 = vmatpush.msra.mxu0 0.0
        %541 = vmatpush.msra.mxu0 0.0
        %542 = vmatpush.msra.mxu0 0.0
        %543 = vmatpush.msra.mxu0 0.0
        %544 = vmatpush.msra.mxu0 0.0
        %545 = vmatpush.msra.mxu0 %v524
        %546 = vmatmul.f32.gmra.mxu0 %v522
        %v547 = vpop.f32.mrf.mxu0
        %v548 = vadd.f32 0.0, %v547
        %549 = vdwg.mxu0
        %550 = vmatpush.msra.mxu0 0.0
        %551 = vmatpush.msra.mxu0 0.0
        %552 = vmatpush.msra.mxu0 0.0
        %553 = vmatpush.msra.mxu0 0.0
        %554 = vmatpush.msra.mxu0 0.0
        %555 = vmatpush.msra.mxu0 0.0
        %556 = vmatpush.msra.mxu0 0.0
        %557 = vmatpush.msra.mxu0 0.0
        %558 = vmatpush.msra.mxu0 0.0
        %559 = vmatpush.msra.mxu0 0.0
        %560 = vmatpush.msra.mxu0 0.0
        %561 = vmatpush.msra.mxu0 0.0
        %562 = vmatpush.msra.mxu0 0.0
        %563 = vmatpush.msra.mxu0 0.0
        %564 = vmatpush.msra.mxu0 0.0
        %565 = vmatpush.msra.mxu0 %v526
        %566 = vmatmul.f32.gmra.mxu0 %v522
        %v567 = vpop.f32.mrf.mxu0
        %v568 = vadd.f32 0.0, %v567
        %569 = vdwg.mxu0
        %570 = vmatpush.msra.mxu0 0.0
        %571 = vmatpush.msra.mxu0 0.0
        %572 = vmatpush.msra.mxu0 0.0
        %573 = vmatpush.msra.mxu0 0.0
        %574 = vmatpush.msra.mxu0 0.0
        %575 = vmatpush.msra.mxu0 0.0
        %576 = vmatpush.msra.mxu0 0.0
        %577 = vmatpush.msra.mxu0 0.0
        %578 = vmatpush.msra.mxu0 0.0
        %579 = vmatpush.msra.mxu0 0.0
        %580 = vmatpush.msra.mxu0 0.0
        %581 = vmatpush.msra.mxu0 0.0
        %582 = vmatpush.msra.mxu0 0.0
        %583 = vmatpush.msra.mxu0 0.0
        %584 = vmatpush.msra.mxu0 0.0
        %585 = vmatpush.msra.mxu0 %v528
        %586 = vmatmul.f32.gmra.mxu0 %v522
        %v587 = vpop.f32.mrf.mxu0
        %v588 = vadd.f32 0.0, %v587
        %589 = vdwg.mxu0
        %v590 = vadd.f32 %v499, %v548
        %v591 = vadd.f32 %v500, %v568
        %v592 = vadd.f32 %v501, %v588
        %593 = vst [vmem:[#allocation1] ss:$2 sm:$0xff] %v142
        %s594 = scalar_lea.vmem [#allocation1], 16
        %595 = vst [vmem:[%s594] ss:$2 sm:$0xff] %v143
        %v596 = vld.sshfl [vmem:[#allocation1] sm:$0xff pattern:$0x75316420]
        %v597 = vld.sshfl [vmem:[#allocation1 + $0x8] sm:$0xff pattern:$0x75316420]
        %v598 = vld.sshfl [vmem:[#allocation1 + $0x10] sm:$0xff pattern:$0x75316420]
        %v599 = vld.sshfl [vmem:[#allocation1 + $0x18] sm:$0xff pattern:$0x75316420]
        %600 = vrot.lane.b32.xlu0 %v596, 84
        %v601 = vpop.permute.xlu0 %600
        %602 = vrot.lane.b32.xlu0 %v597, 84
        %v603 = vpop.permute.xlu0 %602
        %604 = vrot.lane.b32.xlu0 %v598, 84
        %v605 = vpop.permute.xlu0 %604
        %606 = vrot.lane.b32.xlu0 %v599, 84
        %v607 = vpop.permute.xlu0 %606
        %vm608 = vcmask 687104
        %v609 = vsel %vm608, %v601, %v603
        %v610 = vsel %vm608, %v603, %v605
        %v611 = vsel %vm608, %v605, %v607
        %v613 = vsel %vm174, %v149, 0
        %v615 = vsel %vm178, %v609, 0
        %v617 = vsel %vm178, %v610, 0
        %v619 = vsel %vm178, %v611, 0
        %621 = vmatpush.msra.mxu0 0.0
        %622 = vmatpush.msra.mxu0 0.0
        %623 = vmatpush.msra.mxu0 0.0
        %624 = vmatpush.msra.mxu0 0.0
        %625 = vmatpush.msra.mxu0 0.0
        %626 = vmatpush.msra.mxu0 0.0
        %627 = vmatpush.msra.mxu0 0.0
        %628 = vmatpush.msra.mxu0 0.0
        %629 = vmatpush.msra.mxu0 0.0
        %630 = vmatpush.msra.mxu0 0.0
        %631 = vmatpush.msra.mxu0 0.0
        %632 = vmatpush.msra.mxu0 0.0
        %633 = vmatpush.msra.mxu0 0.0
        %634 = vmatpush.msra.mxu0 0.0
        %635 = vmatpush.msra.mxu0 0.0
        %636 = vmatpush.msra.mxu0 %v615
        %637 = vmatmul.f32.gmra.mxu0 %v613
        %v638 = vpop.f32.mrf.mxu0
        %v639 = vadd.f32 0.0, %v638
        %640 = vdwg.mxu0
        %641 = vmatpush.msra.mxu0 0.0
        %642 = vmatpush.msra.mxu0 0.0
        %643 = vmatpush.msra.mxu0 0.0
        %644 = vmatpush.msra.mxu0 0.0
        %645 = vmatpush.msra.mxu0 0.0
        %646 = vmatpush.msra.mxu0 0.0
        %647 = vmatpush.msra.mxu0 0.0
        %648 = vmatpush.msra.mxu0 0.0
        %649 = vmatpush.msra.mxu0 0.0
        %650 = vmatpush.msra.mxu0 0.0
        %651 = vmatpush.msra.mxu0 0.0
        %652 = vmatpush.msra.mxu0 0.0
        %653 = vmatpush.msra.mxu0 0.0
        %654 = vmatpush.msra.mxu0 0.0
        %655 = vmatpush.msra.mxu0 0.0
        %656 = vmatpush.msra.mxu0 %v617
        %657 = vmatmul.f32.gmra.mxu0 %v613
        %v658 = vpop.f32.mrf.mxu0
        %v659 = vadd.f32 0.0, %v658
        %660 = vdwg.mxu0
        %661 = vmatpush.msra.mxu0 0.0
        %662 = vmatpush.msra.mxu0 0.0
        %663 = vmatpush.msra.mxu0 0.0
        %664 = vmatpush.msra.mxu0 0.0
        %665 = vmatpush.msra.mxu0 0.0
        %666 = vmatpush.msra.mxu0 0.0
        %667 = vmatpush.msra.mxu0 0.0
        %668 = vmatpush.msra.mxu0 0.0
        %669 = vmatpush.msra.mxu0 0.0
        %670 = vmatpush.msra.mxu0 0.0
        %671 = vmatpush.msra.mxu0 0.0
        %672 = vmatpush.msra.mxu0 0.0
        %673 = vmatpush.msra.mxu0 0.0
        %674 = vmatpush.msra.mxu0 0.0
        %675 = vmatpush.msra.mxu0 0.0
        %676 = vmatpush.msra.mxu0 %v619
        %677 = vmatmul.f32.gmra.mxu0 %v613
        %v678 = vpop.f32.mrf.mxu0
        %v679 = vadd.f32 0.0, %v678
        %680 = vdwg.mxu0
        %v681 = vadd.f32 %v590, %v639
        %v682 = vadd.f32 %v591, %v659
        %v683 = vadd.f32 %v592, %v679
        %684 = vst [vmem:[#allocation1] ss:$2 sm:$0xff] %v142
        %s685 = scalar_lea.vmem [#allocation1], 16
        %686 = vst [vmem:[%s685] ss:$2 sm:$0xff] %v143
        %v687 = vld.sshfl [vmem:[#allocation1] sm:$0xff pattern:$0x75316420]
        %v688 = vld.sshfl [vmem:[#allocation1 + $0x8] sm:$0xff pattern:$0x75316420]
        %v689 = vld.sshfl [vmem:[#allocation1 + $0x10] sm:$0xff pattern:$0x75316420]
        %v690 = vld.sshfl [vmem:[#allocation1 + $0x18] sm:$0xff pattern:$0x75316420]
        %691 = vrot.lane.b32.xlu0 %v687, 48
        %v692 = vpop.permute.xlu0 %691
        %693 = vrot.lane.b32.xlu0 %v688, 48
        %v694 = vpop.permute.xlu0 %693
        %695 = vrot.lane.b32.xlu0 %v689, 48
        %v696 = vpop.permute.xlu0 %695
        %697 = vrot.lane.b32.xlu0 %v690, 48
        %v698 = vpop.permute.xlu0 %697
        %vm699 = vcmask 392192
        %v700 = vsel %vm699, %v692, %v694
        %v701 = vsel %vm699, %v694, %v696
        %v702 = vsel %vm699, %v696, %v698
        %v704 = vsel %vm174, %v150, 0
        %v706 = vsel %vm178, %v700, 0
        %v708 = vsel %vm178, %v701, 0
        %v710 = vsel %vm178, %v702, 0
        %712 = vmatpush.msra.mxu0 0.0
        %713 = vmatpush.msra.mxu0 0.0
        %714 = vmatpush.msra.mxu0 0.0
        %715 = vmatpush.msra.mxu0 0.0
        %716 = vmatpush.msra.mxu0 0.0
        %717 = vmatpush.msra.mxu0 0.0
        %718 = vmatpush.msra.mxu0 0.0
        %719 = vmatpush.msra.mxu0 0.0
        %720 = vmatpush.msra.mxu0 0.0
        %721 = vmatpush.msra.mxu0 0.0
        %722 = vmatpush.msra.mxu0 0.0
        %723 = vmatpush.msra.mxu0 0.0
        %724 = vmatpush.msra.mxu0 0.0
        %725 = vmatpush.msra.mxu0 0.0
        %726 = vmatpush.msra.mxu0 0.0
        %727 = vmatpush.msra.mxu0 %v706
        %728 = vmatmul.f32.gmra.mxu0 %v704
        %v729 = vpop.f32.mrf.mxu0
        %v730 = vadd.f32 0.0, %v729
        %731 = vdwg.mxu0
        %732 = vmatpush.msra.mxu0 0.0
        %733 = vmatpush.msra.mxu0 0.0
        %734 = vmatpush.msra.mxu0 0.0
        %735 = vmatpush.msra.mxu0 0.0
        %736 = vmatpush.msra.mxu0 0.0
        %737 = vmatpush.msra.mxu0 0.0
        %738 = vmatpush.msra.mxu0 0.0
        %739 = vmatpush.msra.mxu0 0.0
        %740 = vmatpush.msra.mxu0 0.0
        %741 = vmatpush.msra.mxu0 0.0
        %742 = vmatpush.msra.mxu0 0.0
        %743 = vmatpush.msra.mxu0 0.0
        %744 = vmatpush.msra.mxu0 0.0
        %745 = vmatpush.msra.mxu0 0.0
        %746 = vmatpush.msra.mxu0 0.0
        %747 = vmatpush.msra.mxu0 %v708
        %748 = vmatmul.f32.gmra.mxu0 %v704
        %v749 = vpop.f32.mrf.mxu0
        %v750 = vadd.f32 0.0, %v749
        %751 = vdwg.mxu0
        %752 = vmatpush.msra.mxu0 0.0
        %753 = vmatpush.msra.mxu0 0.0
        %754 = vmatpush.msra.mxu0 0.0
        %755 = vmatpush.msra.mxu0 0.0
        %756 = vmatpush.msra.mxu0 0.0
        %757 = vmatpush.msra.mxu0 0.0
        %758 = vmatpush.msra.mxu0 0.0
        %759 = vmatpush.msra.mxu0 0.0
        %760 = vmatpush.msra.mxu0 0.0
        %761 = vmatpush.msra.mxu0 0.0
        %762 = vmatpush.msra.mxu0 0.0
        %763 = vmatpush.msra.mxu0 0.0
        %764 = vmatpush.msra.mxu0 0.0
        %765 = vmatpush.msra.mxu0 0.0
        %766 = vmatpush.msra.mxu0 0.0
        %767 = vmatpush.msra.mxu0 %v710
        %768 = vmatmul.f32.gmra.mxu0 %v704
        %v769 = vpop.f32.mrf.mxu0
        %v770 = vadd.f32 0.0, %v769
        %771 = vdwg.mxu0
        %v772 = vadd.f32 %v681, %v730
        %v773 = vadd.f32 %v682, %v750
        %v774 = vadd.f32 %v683, %v770
        %775 = vst [vmem:[#allocation1] ss:$2 sm:$0xff] %v142
        %s776 = scalar_lea.vmem [#allocation1], 16
        %777 = vst [vmem:[%s776] ss:$2 sm:$0xff] %v143
        %v778 = vld.sshfl [vmem:[#allocation1] sm:$0xff pattern:$0x75316420]
        %v779 = vld.sshfl [vmem:[#allocation1 + $0x8] sm:$0xff pattern:$0x75316420]
        %v780 = vld.sshfl [vmem:[#allocation1 + $0x10] sm:$0xff pattern:$0x75316420]
        %v781 = vld.sshfl [vmem:[#allocation1 + $0x18] sm:$0xff pattern:$0x75316420]
        %782 = vrot.lane.b32.xlu0 %v778, 46
        %v783 = vpop.permute.xlu0 %782
        %784 = vrot.lane.b32.xlu0 %v779, 46
        %v785 = vpop.permute.xlu0 %784
        %786 = vrot.lane.b32.xlu0 %v780, 46
        %v787 = vpop.permute.xlu0 %786
        %788 = vrot.lane.b32.xlu0 %v781, 46
        %v789 = vpop.permute.xlu0 %788
        %vm790 = vcmask 375808
        %v791 = vsel %vm790, %v783, %v785
        %v792 = vsel %vm790, %v785, %v787
        %v793 = vsel %vm790, %v787, %v789
        %v795 = vsel %vm174, %v151, 0
        %v797 = vsel %vm178, %v791, 0
        %v799 = vsel %vm178, %v792, 0
        %v801 = vsel %vm178, %v793, 0
        %803 = vmatpush.msra.mxu0 0.0
        %804 = vmatpush.msra.mxu0 0.0
        %805 = vmatpush.msra.mxu0 0.0
        %806 = vmatpush.msra.mxu0 0.0
        %807 = vmatpush.msra.mxu0 0.0
        %808 = vmatpush.msra.mxu0 0.0
        %809 = vmatpush.msra.mxu0 0.0
        %810 = vmatpush.msra.mxu0 0.0
        %811 = vmatpush.msra.mxu0 0.0
        %812 = vmatpush.msra.mxu0 0.0
        %813 = vmatpush.msra.mxu0 0.0
        %814 = vmatpush.msra.mxu0 0.0
        %815 = vmatpush.msra.mxu0 0.0
        %816 = vmatpush.msra.mxu0 0.0
        %817 = vmatpush.msra.mxu0 0.0
        %818 = vmatpush.msra.mxu0 %v797
        %819 = vmatmul.f32.gmra.mxu0 %v795
        %v820 = vpop.f32.mrf.mxu0
        %v821 = vadd.f32 0.0, %v820
        %822 = vdwg.mxu0
        %823 = vmatpush.msra.mxu0 0.0
        %824 = vmatpush.msra.mxu0 0.0
        %825 = vmatpush.msra.mxu0 0.0
        %826 = vmatpush.msra.mxu0 0.0
        %827 = vmatpush.msra.mxu0 0.0
        %828 = vmatpush.msra.mxu0 0.0
        %829 = vmatpush.msra.mxu0 0.0
        %830 = vmatpush.msra.mxu0 0.0
        %831 = vmatpush.msra.mxu0 0.0
        %832 = vmatpush.msra.mxu0 0.0
        %833 = vmatpush.msra.mxu0 0.0
        %834 = vmatpush.msra.mxu0 0.0
        %835 = vmatpush.msra.mxu0 0.0
        %836 = vmatpush.msra.mxu0 0.0
        %837 = vmatpush.msra.mxu0 0.0
        %838 = vmatpush.msra.mxu0 %v799
        %839 = vmatmul.f32.gmra.mxu0 %v795
        %v840 = vpop.f32.mrf.mxu0
        %v841 = vadd.f32 0.0, %v840
        %842 = vdwg.mxu0
        %843 = vmatpush.msra.mxu0 0.0
        %844 = vmatpush.msra.mxu0 0.0
        %845 = vmatpush.msra.mxu0 0.0
        %846 = vmatpush.msra.mxu0 0.0
        %847 = vmatpush.msra.mxu0 0.0
        %848 = vmatpush.msra.mxu0 0.0
        %849 = vmatpush.msra.mxu0 0.0
        %850 = vmatpush.msra.mxu0 0.0
        %851 = vmatpush.msra.mxu0 0.0
        %852 = vmatpush.msra.mxu0 0.0
        %853 = vmatpush.msra.mxu0 0.0
        %854 = vmatpush.msra.mxu0 0.0
        %855 = vmatpush.msra.mxu0 0.0
        %856 = vmatpush.msra.mxu0 0.0
        %857 = vmatpush.msra.mxu0 0.0
        %858 = vmatpush.msra.mxu0 %v801
        %859 = vmatmul.f32.gmra.mxu0 %v795
        %v860 = vpop.f32.mrf.mxu0
        %v861 = vadd.f32 0.0, %v860
        %862 = vdwg.mxu0
        %v863 = vadd.f32 %v772, %v821
        %v864 = vadd.f32 %v773, %v841
        %v865 = vadd.f32 %v774, %v861
        %866 = vst [vmem:[#allocation1] ss:$2 sm:$0xff] %v142
        %s867 = scalar_lea.vmem [#allocation1], 16
        %868 = vst [vmem:[%s867] ss:$2 sm:$0xff] %v143
        %v869 = vld.sshfl [vmem:[#allocation1] sm:$0xff pattern:$0x75316420]
        %v870 = vld.sshfl [vmem:[#allocation1 + $0x8] sm:$0xff pattern:$0x75316420]
        %v871 = vld.sshfl [vmem:[#allocation1 + $0x10] sm:$0xff pattern:$0x75316420]
        %v872 = vld.sshfl [vmem:[#allocation1 + $0x18] sm:$0xff pattern:$0x75316420]
        %873 = vrot.lane.b32.xlu0 %v869, 44
        %v874 = vpop.permute.xlu0 %873
        %875 = vrot.lane.b32.xlu0 %v870, 44
        %v876 = vpop.permute.xlu0 %875
        %877 = vrot.lane.b32.xlu0 %v871, 44
        %v878 = vpop.permute.xlu0 %877
        %879 = vrot.lane.b32.xlu0 %v872, 44
        %v880 = vpop.permute.xlu0 %879
        %vm881 = vcmask 359424
        %v882 = vsel %vm881, %v874, %v876
        %v883 = vsel %vm881, %v876, %v878
        %v884 = vsel %vm881, %v878, %v880
        %v886 = vsel %vm174, %v152, 0
        %v888 = vsel %vm178, %v882, 0
        %v890 = vsel %vm178, %v883, 0
        %v892 = vsel %vm178, %v884, 0
        %894 = vmatpush.msra.mxu0 0.0
        %895 = vmatpush.msra.mxu0 0.0
        %896 = vmatpush.msra.mxu0 0.0
        %897 = vmatpush.msra.mxu0 0.0
        %898 = vmatpush.msra.mxu0 0.0
        %899 = vmatpush.msra.mxu0 0.0
        %900 = vmatpush.msra.mxu0 0.0
        %901 = vmatpush.msra.mxu0 0.0
        %902 = vmatpush.msra.mxu0 0.0
        %903 = vmatpush.msra.mxu0 0.0
        %904 = vmatpush.msra.mxu0 0.0
        %905 = vmatpush.msra.mxu0 0.0
        %906 = vmatpush.msra.mxu0 0.0
        %907 = vmatpush.msra.mxu0 0.0
        %908 = vmatpush.msra.mxu0 0.0
        %909 = vmatpush.msra.mxu0 %v888
        %910 = vmatmul.f32.gmra.mxu0 %v886
        %v911 = vpop.f32.mrf.mxu0
        %v912 = vadd.f32 0.0, %v911
        %913 = vdwg.mxu0
        %914 = vmatpush.msra.mxu0 0.0
        %915 = vmatpush.msra.mxu0 0.0
        %916 = vmatpush.msra.mxu0 0.0
        %917 = vmatpush.msra.mxu0 0.0
        %918 = vmatpush.msra.mxu0 0.0
        %919 = vmatpush.msra.mxu0 0.0
        %920 = vmatpush.msra.mxu0 0.0
        %921 = vmatpush.msra.mxu0 0.0
        %922 = vmatpush.msra.mxu0 0.0
        %923 = vmatpush.msra.mxu0 0.0
        %924 = vmatpush.msra.mxu0 0.0
        %925 = vmatpush.msra.mxu0 0.0
        %926 = vmatpush.msra.mxu0 0.0
        %927 = vmatpush.msra.mxu0 0.0
        %928 = vmatpush.msra.mxu0 0.0
        %929 = vmatpush.msra.mxu0 %v890
        %930 = vmatmul.f32.gmra.mxu0 %v886
        %v931 = vpop.f32.mrf.mxu0
        %v932 = vadd.f32 0.0, %v931
        %933 = vdwg.mxu0
        %934 = vmatpush.msra.mxu0 0.0
        %935 = vmatpush.msra.mxu0 0.0
        %936 = vmatpush.msra.mxu0 0.0
        %937 = vmatpush.msra.mxu0 0.0
        %938 = vmatpush.msra.mxu0 0.0
        %939 = vmatpush.msra.mxu0 0.0
        %940 = vmatpush.msra.mxu0 0.0
        %941 = vmatpush.msra.mxu0 0.0
        %942 = vmatpush.msra.mxu0 0.0
        %943 = vmatpush.msra.mxu0 0.0
        %944 = vmatpush.msra.mxu0 0.0
        %945 = vmatpush.msra.mxu0 0.0
        %946 = vmatpush.msra.mxu0 0.0
        %947 = vmatpush.msra.mxu0 0.0
        %948 = vmatpush.msra.mxu0 0.0
        %949 = vmatpush.msra.mxu0 %v892
        %950 = vmatmul.f32.gmra.mxu0 %v886
        %v951 = vpop.f32.mrf.mxu0
        %v952 = vadd.f32 0.0, %v951
        %953 = vdwg.mxu0
        %v954 = vadd.f32 %v863, %v912
        %v955 = vadd.f32 %v864, %v932
        %v956 = vadd.f32 %v865, %v952
        %957 = vst [vmem:[%s136] sm:$0xff] %v954
        %958 = vst [vmem:[%s136 + $0x8] sm:$0xff] %v955
        %959 = vst [vmem:[%s136 + $0x10] sm:$0xff] %v956
        %s960 = sand.u32 %s71, 1
        %s961 = scalar_lea.sflag [#allocation3], %s960
        %s962 = sand.u32 %s71, 1
        %s963 = smul.addr %s962, 24
        %s964 = scalar_lea.vmem [#allocation2], %s963
        // Predicated region
        $region29: #{tpu_custom_call.1} parent=27 // pred_check
          %p965 = pneg %p81
        $region30: #{tpu_custom_call.1} parent=27 // pred_check_branch
          %967 = sbr.rel (%p965) target = $region32
        $region31: #{tpu_custom_call.1} parent=27 // pred_region
          %969 = vsyncadd %s961, 0
          %s970 = smul.addr %s16, 3
          %s971 = smul.addr %s970, 8
          %s972 = scalar_lea.hbm %s2, %s971
          %s974 = sshll.u32 %s964, 4
          %s975 = int_to_ptr.vmem [resolvable:$true] %s974
          %s976 = sshll.u32 %s972, 4
          %s977 = int_to_ptr.hbm [resolvable:$true] %s976
          %979 = dma.vmem_to_hbm [thread:$0]  %s975, 384, %s977, %s961
        $region32: #{tpu_custom_call.1} parent=27 // pred_fallthru
          _
      $region28: #{tpu_custom_call.1} parent=5 // pred_fallthru
        _
      %p980 = scmp.le.s32.totalorder 2, %s11
      // Predicated region
      $region33: #{tpu_custom_call.1} parent=5 // pred_check
        %p981 = pneg %p980
      $region34: #{tpu_custom_call.1} parent=5 // pred_check_branch
        %983 = sbr.rel (%p981) target = $region36
      $region35: #{tpu_custom_call.1} parent=5 // pred_region
        %s984 = ssub.s32 %s11, 2
        // Predicated region
        $region37: #{tpu_custom_call.1} parent=35 // pred_check
          %p985 = pneg %p87
        $region38: #{tpu_custom_call.1} parent=35 // pred_check_branch
          %987 = sbr.rel (%p985) target = $region40
        $region39: #{tpu_custom_call.1} parent=35 // pred_region
          %s988 = sand.u32 %s72, 1
          %s989 = scalar_lea.sflag [#allocation3], %s988
          %s990 = sand.u32 %s72, 1
          %s991 = smul.addr %s990, 24
          %s992 = scalar_lea.vmem [#allocation2], %s991
          %994 = dma.done %s989, 384
        $region40: #{tpu_custom_call.1} parent=35 // pred_fallthru
          _
      $region36: #{tpu_custom_call.1} parent=5 // pred_fallthru
        _
    $region6: #{tpu_custom_call.1} parent=1 // loop_footer
      %s15 = sadd.s32 1, %s11
    $region7: #{tpu_custom_call.1} parent=1 // loop_footer_branch
      %10 = sbr.rel target = $region3
    $region8: #{tpu_custom_call.1} parent=1 // loop_exit
      _
    %995 = vsyncpa [#allocation3], 1
    %s996 = scalar_lea.sflag [#allocation3], 1
    %997 = vsyncpa %s996, 1

</llo_original>
